<compile_context>
chip_gen: v6e
topology: v6e:2x2x1
jax: 0.10.0
libtpu: 0.0.40
codegen_flags: <defaults>
</compile_context>

<pallas_src>
import functools

import numpy as np
import jax
import jax.numpy as jnp
from jax import lax
from jax.experimental import pallas as pl
from jax.experimental.pallas import tpu as pltpu

KERNEL_SIZE = 3
POOLING_KERNEL_SIZES = (2, 2)


def _extra_frames():
    e = 0
    for pool_size in POOLING_KERNEL_SIZES[::-1]:
        e = e * pool_size + KERNEL_SIZE - 1
    return e  # == 6


# ---------------------------------------------------------------------------
# One-time parameter preparation (hoisted out of the per-call wrapper).
# ---------------------------------------------------------------------------
def prepare_params(params, input_feat_per_channel):
    """Expand conv weights into lane-dense matmul form.  Call once."""
    w1, b1, w2, b2, wp, bp = (params[k] for k in
                              ("conv1_w", "conv1_b", "conv2_w", "conv2_b",
                               "proj_w", "proj_b"))
    F = input_feat_per_channel
    C = w1.shape[0]
    E = wp.shape[0]
    Fp = F + 2                  # feature axis with a 1-column zero halo
    Hp = Fp * C                 # conv1 output width (halo kept -> conv2 needs no pad)
    H = F * C                   # conv2 output width (feeds out_proj)

    # structural selectors: sel_kw[fp_in, f] = 1 iff fp_in == f + kw
    sels = []
    for kw in range(3):
        s = np.zeros((Fp, F), np.float32)
        for f in range(F):
            s[f + kw, f] = 1.0
        sels.append(jnp.asarray(s))

    # conv1 expanded weight: (3*Fp, Hp); row = kh*Fp + fp_in, col = fp_out*C + c
    blocks = []
    for kh in range(3):
        m = jnp.zeros((Fp, F, C), jnp.float32)
        for kw in range(3):
            m = m + sels[kw][:, :, None] * w1[:, 0, kh, kw][None, None, :]
        m = jnp.pad(m, ((0, 0), (1, 1), (0, 0)))     # zero halo output columns
        blocks.append(m.reshape(Fp, Hp))
    w1_mat = jnp.concatenate(blocks, axis=0)         # (3*Fp, Hp)
    b1_row = jnp.pad(jnp.tile(b1[None, :], (F, 1)),
                     ((1, 1), (0, 0))).reshape(1, Hp)

    # conv2 expanded weight: (3, Hp, H); row = fp_in*C + ci, col = f*C + co
    mats = []
    for kh in range(3):
        m = jnp.zeros((Fp, C, F, C), jnp.float32)
        for kw in range(3):
            wkk = jnp.transpose(w2[:, :, kh, kw])     # (ci, co)
            m = m + sels[kw][:, None, :, None] * wkk[None, :, None, :]
        mats.append(m.reshape(Hp, H))
    w2_mat = jnp.stack(mats, axis=0)                  # (3, Hp, H)
    b2_row = jnp.tile(b2[None, :], (F, 1)).reshape(1, H)

    # out_proj: torch input index is ci*F + f; kernel lane index is f*C + ci
    wp_mat = jnp.transpose(wp.reshape(E, C, F), (2, 1, 0)).reshape(H, E)
    bp_row = bp.reshape(1, E)

    return {
        "F": F, "C": C, "E": E,
        "w1": w1_mat.astype(jnp.bfloat16),
        "b1": b1_row.astype(jnp.float32),
        "w2": w2_mat.astype(jnp.bfloat16),
        "b2": b2_row.astype(jnp.float32),
        "wp": wp_mat.astype(jnp.bfloat16),
        "bp": bp_row.astype(jnp.float32),
    }


# ---------------------------------------------------------------------------
# Kernel: one batch block, everything lane-dense, three matmul stages.
# ---------------------------------------------------------------------------
def _uniconv_kernel(x_ref, w1_ref, b1_ref, w2_ref, b2_ref, wp_ref, bp_ref,
                    out_ref):
    """x_ref  : (2*Rb, 3*(F+2)) bf16.  Rows [0, Rb) are the even-t1 conv1 taps
                (x[4s], x[4s+1], x[4s+2] concatenated along features), rows
                [Rb, 2*Rb) the odd-t1 taps, both batch-stacked over the block.
       out_ref: (Rb, E) f32 with Rb = b_blk*(T2+1); the last row of each batch
                element's chunk is a garbage row dropped by the wrapper."""
    rb = out_ref.shape[0]

    # conv1 (+ bias + ReLU): one MXU matmul; output lanes = fp*C + c, halo = 0.
    h1 = jnp.dot(x_ref[...], w1_ref[...], preferred_element_type=jnp.float32)
    h1 = jnp.maximum(h1 + b1_ref[...], 0.0)            # (2*Rb, Hp) f32

    h1_e = h1[:rb].astype(jnp.bfloat16)                # conv1 rows 2*t2     (kh=0)
    h1_o = h1[rb:].astype(jnp.bfloat16)                # conv1 rows 2*t2 + 1 (kh=1)
    h1_n = h1[1:rb + 1].astype(jnp.bfloat16)           # conv1 rows 2*t2 + 2 (kh=2)

    # conv2 (+ bias + ReLU): three MXU matmuls accumulated in f32.
    acc = jnp.dot(h1_e, w2_ref[0], preferred_element_type=jnp.float32)
    acc = acc + jnp.dot(h1_o, w2_ref[1], preferred_element_type=jnp.float32)
    acc = acc + jnp.dot(h1_n, w2_ref[2], preferred_element_type=jnp.float32)
    h2 = jnp.maximum(acc + b2_ref[...], 0.0).astype(jnp.bfloat16)   # (Rb, H)

    # out_proj
    out = jnp.dot(h2, wp_ref[...], preferred_element_type=jnp.float32) + bp_ref[...]
    out_ref[...] = out.astype(out_ref.dtype)


# ---------------------------------------------------------------------------
# Forward wrapper.
# ---------------------------------------------------------------------------
def unidirectional_conv2d_forward(fbank, fbk_lengths, prep):
    """fbank: (B, T, F) float32, fbk_lengths: (B,) int32.

    Returns (x, padding_mask) with x: (T2, B, E), padding_mask: (B, T2) bool.
    """
    B, T, F = fbank.shape
    assert F == prep["F"], (F, prep["F"])
    C, E = prep["C"], prep["E"]
    Fp = F + 2
    Hp = Fp * C
    H = F * C
    K1 = 3 * Fp

    T1 = (T - KERNEL_SIZE) // 2 + 1
    T2 = (T1 - KERNEL_SIZE) // 2 + 1
    rows = T2 + 1                       # +1 garbage row per batch element

    # Two parallel grid steps so both v7x TensorCores get work; each step
    # batch-stacks b_blk elements into the matmul M dimension.
    num_blocks = 1 if B == 1 else 2
    b_blk = -(-B // num_blocks)
    Bp = num_blocks * b_blk
    Rb = b_blk * rows

    # ---- slab gathering: plain-JAX layout plumbing, no compute ----
    t_need = 4 * T2 + 5
    x_pad = jnp.pad(fbank, ((0, Bp - B), (0, max(0, t_need - T)), (1, 1)))

    def slab(k):                        # rows 4*s + k, s in [0, rows)
        return x_pad[:, k::4, :][:, :rows, :]

    slab_e = jnp.concatenate([slab(0), slab(1), slab(2)], axis=-1)   # even t1 taps
    slab_o = jnp.concatenate([slab(2), slab(3), slab(4)], axis=-1)   # odd  t1 taps
    x_slab = jnp.concatenate([slab_e.reshape(num_blocks, Rb, K1),
                              slab_o.reshape(num_blocks, Rb, K1)],
                             axis=1).astype(jnp.bfloat16)            # (nb, 2*Rb, K1)

    out = pl.pallas_call(
        _uniconv_kernel,
        out_shape=jax.ShapeDtypeStruct((num_blocks, Rb, E), jnp.float32),
        grid_spec=pltpu.PrefetchScalarGridSpec(
            num_scalar_prefetch=0,
            grid=(num_blocks,),
            in_specs=[
                pl.BlockSpec((None, 2 * Rb, K1), lambda i: (i, 0, 0)),
                pl.BlockSpec((K1, Hp), lambda i: (0, 0)),
                pl.BlockSpec((1, Hp), lambda i: (0, 0)),
                pl.BlockSpec((3, Hp, H), lambda i: (0, 0, 0)),
                pl.BlockSpec((1, H), lambda i: (0, 0)),
                pl.BlockSpec((H, E), lambda i: (0, 0)),
                pl.BlockSpec((1, E), lambda i: (0, 0)),
            ],
            out_specs=pl.BlockSpec((None, Rb, E), lambda i: (i, 0, 0)),
        ),
        compiler_params=pltpu.CompilerParams(dimension_semantics=("parallel",)),
    )(x_slab, prep["w1"], prep["b1"], prep["w2"], prep["b2"],
      prep["wp"], prep["bp"])

    # (nb, b_blk*rows, E) -> (Bp, rows, E); drop garbage rows / padded batches.
    out = out.reshape(Bp, rows, E)[:B, :T2, :]
    x = jnp.transpose(out, (1, 0, 2))                                 # (T2, B, E)

    # length / padding-mask bookkeeping (plain JAX glue)
    input_lengths = fbk_lengths - _extra_frames()
    for s in POOLING_KERNEL_SIZES:
        input_lengths = jnp.ceil(input_lengths.astype(jnp.float32) / s).astype(jnp.int32)
    padding_mask = jnp.arange(T2, dtype=jnp.int32)[None, :] >= input_lengths[:, None]
    return x, padding_mask


# ---------------------------------------------------------------------------
# Pure-JAX reference (mirrors the PyTorch forward, non-incremental path).
# ---------------------------------------------------------------------------
def _reference_forward(fbank, fbk_lengths, params):
    B, T, F = fbank.shape
    w1, b1, w2, b2, wp, bp = (params[k] for k in
                              ("conv1_w", "conv1_b", "conv2_w", "conv2_b",
                               "proj_w", "proj_b"))
    x = fbank[:, None, :, :]                                          # (B,1,T,F)
    dn = ("NCHW", "OIHW", "NCHW")
    y = lax.conv_general_dilated(x, w1, (2, 1), ((0, 0), (1, 1)),
                                 dimension_numbers=dn,
                                 precision=lax.Precision.HIGHEST)
    y = jnp.maximum(y + b1[None, :, None, None], 0.0)
    y = lax.conv_general_dilated(y, w2, (2, 1), ((0, 0), (1, 1)),
                                 dimension_numbers=dn,
                                 precision=lax.Precision.HIGHEST)
    y = jnp.maximum(y + b2[None, :, None, None], 0.0)                 # (B,C,T2,F)
    T2 = y.shape[2]
    C = y.shape[1]
    y = jnp.transpose(y, (2, 0, 1, 3)).reshape(T2, B, C * F)
    out = jnp.einsum("tbi,ei->tbe", y, wp,
                     precision=lax.Precision.HIGHEST) + bp
    return out


if __name__ == "__main__":
    # module hyper-params: input_channels=1, input_feat_per_channel=16,
    # conv_out_channels=8, encoder_embed_dim=32
    B, T, F, C, E = 2, 32, 16, 8, 32

    key = jax.random.PRNGKey(0)
    ks = jax.random.split(key, 7)
    params = {
        "conv1_w": jax.random.normal(ks[0], (C, 1, 3, 3), jnp.float32) / 3.0,
        "conv1_b": jax.random.normal(ks[1], (C,), jnp.float32) * 0.1,
        "conv2_w": jax.random.normal(ks[2], (C, C, 3, 3), jnp.float32) / (3.0 * jnp.sqrt(C * 1.0)),
        "conv2_b": jax.random.normal(ks[3], (C,), jnp.float32) * 0.1,
        "proj_w": jax.random.normal(ks[4], (E, C * F), jnp.float32) / jnp.sqrt(C * F * 1.0),
        "proj_b": jax.random.normal(ks[5], (E,), jnp.float32) * 0.1,
    }
    fbank = jax.random.normal(ks[6], (B, T, F), jnp.float32)
    fbk_lengths = jnp.array([T, 20], dtype=jnp.int32)

    # weight re-layout hoisted out of the per-call path (done exactly once)
    prep = prepare_params(params, input_feat_per_channel=F)

    fwd = jax.jit(functools.partial(unidirectional_conv2d_forward, prep=prep))
    x, padding_mask = fwd(fbank, fbk_lengths)
    x = jax.block_until_ready(x)
    padding_mask = jax.block_until_ready(padding_mask)

    # sanity check against a pure-JAX f32 reference; kernel matmuls use bf16
    # operands with f32 accumulation, so allow bf16-level error.
    ref = _reference_forward(fbank, fbk_lengths, params)
    assert x.shape == ref.shape, (x.shape, ref.shape)
    max_err = float(jnp.max(jnp.abs(x - ref)))
    assert max_err < 7.5e-2, f"max abs err {max_err}"
    assert padding_mask.shape == (B, x.shape[0])

    print("KERNEL_OK")
</pallas_src>

<mosaic_0001>
module attributes {stable_mosaic.version = 11 : i64} {
  func.func @_uniconv_kernel(%arg0: i32, %arg1: memref<1x16x54xbf16, #tpu.memory_space<vmem>>, %arg2: memref<54x144xbf16, #tpu.memory_space<vmem>>, %arg3: memref<1x144xf32, #tpu.memory_space<vmem>>, %arg4: memref<3x144x128xbf16, #tpu.memory_space<vmem>>, %arg5: memref<1x128xf32, #tpu.memory_space<vmem>>, %arg6: memref<128x32xbf16, #tpu.memory_space<vmem>>, %arg7: memref<1x32xf32, #tpu.memory_space<vmem>>, %arg8: memref<1x8x32xf32, #tpu.memory_space<vmem>>) attributes {dimension_semantics = [#tpu.dimension_semantics<parallel>], iteration_bounds = array<i64: 2>, scalar_prefetch = 0 : i64, scratch_operands = 0 : i64, tpu.core_type = #tpu.core_type<tc>, window_params = [{transform_indices = @transform_0, window_bounds = array<i64: 1, 16, 54>}, {pipeline_mode = #tpu.pipeline_mode<synchronous>, transform_indices = @transform_1, window_bounds = array<i64: 54, 144>}, {pipeline_mode = #tpu.pipeline_mode<synchronous>, transform_indices = @transform_2, window_bounds = array<i64: 1, 144>}, {pipeline_mode = #tpu.pipeline_mode<synchronous>, transform_indices = @transform_3, window_bounds = array<i64: 3, 144, 128>}, {pipeline_mode = #tpu.pipeline_mode<synchronous>, transform_indices = @transform_4, window_bounds = array<i64: 1, 128>}, {pipeline_mode = #tpu.pipeline_mode<synchronous>, transform_indices = @transform_5, window_bounds = array<i64: 128, 32>}, {pipeline_mode = #tpu.pipeline_mode<synchronous>, transform_indices = @transform_6, window_bounds = array<i64: 1, 32>}, {transform_indices = @transform_7, window_bounds = array<i64: 1, 8, 32>}]} {
    %c0 = arith.constant 0 : index
    %c0_0 = arith.constant 0 : index
    %c0_1 = arith.constant 0 : index
    %0 = vector.load %arg1[%c0, %c0_0, %c0_1] : memref<1x16x54xbf16, #tpu.memory_space<vmem>>, vector<1x16x54xbf16>
    %1 = vector.shape_cast %0 : vector<1x16x54xbf16> to vector<16x54xbf16>
    %c0_2 = arith.constant 0 : index
    %c0_3 = arith.constant 0 : index
    %2 = vector.load %arg2[%c0_2, %c0_3] : memref<54x144xbf16, #tpu.memory_space<vmem>>, vector<54x144xbf16>
    %cst = arith.constant dense<0.000000e+00> : vector<16x144xf32>
    %3 = tpu.matmul %1, %2, %cst {dimension_numbers = #tpu.dot_dimension_numbers<[1], [0], [0], [1], [0, 0, 1, 1], [], []>} : vector<16x54xbf16>, vector<54x144xbf16>, vector<16x144xf32> -> vector<16x144xf32>
    %c0_4 = arith.constant 0 : index
    %c0_5 = arith.constant 0 : index
    %4 = vector.load %arg3[%c0_4, %c0_5] : memref<1x144xf32, #tpu.memory_space<vmem>>, vector<1x144xf32>
    %5 = vector.broadcast %4 : vector<1x144xf32> to vector<16x144xf32>
    %6 = arith.addf %3, %5 : vector<16x144xf32>
    %cst_6 = arith.constant 0.000000e+00 : f32
    %7 = vector.broadcast %cst_6 : f32 to vector<16x144xf32>
    %8 = arith.maximumf %6, %7 : vector<16x144xf32>
    %9 = vector.extract_strided_slice %8 {offsets = [0, 0], sizes = [8, 144], strides = [1, 1]} : vector<16x144xf32> to vector<8x144xf32>
    %10 = arith.truncf %9 : vector<8x144xf32> to vector<8x144xbf16>
    %11 = vector.extract_strided_slice %8 {offsets = [8, 0], sizes = [8, 144], strides = [1, 1]} : vector<16x144xf32> to vector<8x144xf32>
    %12 = arith.truncf %11 : vector<8x144xf32> to vector<8x144xbf16>
    %13 = vector.extract_strided_slice %8 {offsets = [1, 0], sizes = [8, 144], strides = [1, 1]} : vector<16x144xf32> to vector<8x144xf32>
    %14 = arith.truncf %13 : vector<8x144xf32> to vector<8x144xbf16>
    %c0_7 = arith.constant 0 : index
    %c0_8 = arith.constant 0 : index
    %c0_9 = arith.constant 0 : index
    %15 = vector.load %arg4[%c0_7, %c0_8, %c0_9] : memref<3x144x128xbf16, #tpu.memory_space<vmem>>, vector<1x144x128xbf16>
    %16 = vector.shape_cast %15 : vector<1x144x128xbf16> to vector<144x128xbf16>
    %cst_10 = arith.constant dense<0.000000e+00> : vector<8x128xf32>
    %17 = tpu.matmul %10, %16, %cst_10 {dimension_numbers = #tpu.dot_dimension_numbers<[1], [0], [0], [1], [0, 0, 1, 1], [], []>} : vector<8x144xbf16>, vector<144x128xbf16>, vector<8x128xf32> -> vector<8x128xf32>
    %c1 = arith.constant 1 : index
    %c0_11 = arith.constant 0 : index
    %c0_12 = arith.constant 0 : index
    %18 = vector.load %arg4[%c1, %c0_11, %c0_12] : memref<3x144x128xbf16, #tpu.memory_space<vmem>>, vector<1x144x128xbf16>
    %19 = vector.shape_cast %18 : vector<1x144x128xbf16> to vector<144x128xbf16>
    %cst_13 = arith.constant dense<0.000000e+00> : vector<8x128xf32>
    %20 = tpu.matmul %12, %19, %cst_13 {dimension_numbers = #tpu.dot_dimension_numbers<[1], [0], [0], [1], [0, 0, 1, 1], [], []>} : vector<8x144xbf16>, vector<144x128xbf16>, vector<8x128xf32> -> vector<8x128xf32>
    %21 = arith.addf %17, %20 : vector<8x128xf32>
    %c2 = arith.constant 2 : index
    %c0_14 = arith.constant 0 : index
    %c0_15 = arith.constant 0 : index
    %22 = vector.load %arg4[%c2, %c0_14, %c0_15] : memref<3x144x128xbf16, #tpu.memory_space<vmem>>, vector<1x144x128xbf16>
    %23 = vector.shape_cast %22 : vector<1x144x128xbf16> to vector<144x128xbf16>
    %cst_16 = arith.constant dense<0.000000e+00> : vector<8x128xf32>
    %24 = tpu.matmul %14, %23, %cst_16 {dimension_numbers = #tpu.dot_dimension_numbers<[1], [0], [0], [1], [0, 0, 1, 1], [], []>} : vector<8x144xbf16>, vector<144x128xbf16>, vector<8x128xf32> -> vector<8x128xf32>
    %25 = arith.addf %21, %24 : vector<8x128xf32>
    %c0_17 = arith.constant 0 : index
    %c0_18 = arith.constant 0 : index
    %26 = vector.load %arg5[%c0_17, %c0_18] : memref<1x128xf32, #tpu.memory_space<vmem>>, vector<1x128xf32>
    %27 = vector.broadcast %26 : vector<1x128xf32> to vector<8x128xf32>
    %28 = arith.addf %25, %27 : vector<8x128xf32>
    %cst_19 = arith.constant 0.000000e+00 : f32
    %29 = vector.broadcast %cst_19 : f32 to vector<8x128xf32>
    %30 = arith.maximumf %28, %29 : vector<8x128xf32>
    %31 = arith.truncf %30 : vector<8x128xf32> to vector<8x128xbf16>
    %c0_20 = arith.constant 0 : index
    %c0_21 = arith.constant 0 : index
    %32 = vector.load %arg6[%c0_20, %c0_21] : memref<128x32xbf16, #tpu.memory_space<vmem>>, vector<128x32xbf16>
    %cst_22 = arith.constant dense<0.000000e+00> : vector<8x32xf32>
    %33 = tpu.matmul %31, %32, %cst_22 {dimension_numbers = #tpu.dot_dimension_numbers<[1], [0], [0], [1], [0, 0, 1, 1], [], []>} : vector<8x128xbf16>, vector<128x32xbf16>, vector<8x32xf32> -> vector<8x32xf32>
    %c0_23 = arith.constant 0 : index
    %c0_24 = arith.constant 0 : index
    %34 = vector.load %arg7[%c0_23, %c0_24] : memref<1x32xf32, #tpu.memory_space<vmem>>, vector<1x32xf32>
    %35 = vector.broadcast %34 : vector<1x32xf32> to vector<8x32xf32>
    %36 = arith.addf %33, %35 : vector<8x32xf32>
    %c0_25 = arith.constant 0 : index
    %c0_26 = arith.constant 0 : index
    %c0_27 = arith.constant 0 : index
    %37 = vector.load %arg8[%c0_25, %c0_26, %c0_27] : memref<1x8x32xf32, #tpu.memory_space<vmem>>, vector<1x8x32xf32>
    %38 = vector.shape_cast %37 : vector<1x8x32xf32> to vector<8x32xf32>
    %39 = vector.shape_cast %36 : vector<8x32xf32> to vector<1x8x32xf32>
    tpu.vector_store %arg8[%c0_25, %c0_26, %c0_27], %39 {strides = array<i32>} : memref<1x8x32xf32, #tpu.memory_space<vmem>>, vector<1x8x32xf32>,
    return
  }
  func.func @transform_0(%arg0: i32) -> (i32, i32, i32) {
    %c0_i32 = arith.constant 0 : i32
    %c0_i32_0 = arith.constant 0 : i32
    %c0_i32_1 = arith.constant 0 : i32
    return %arg0, %c0_i32, %c0_i32_0 : i32, i32, i32
  }
  func.func @transform_1(%arg0: i32) -> (i32, i32) {
    %c0_i32 = arith.constant 0 : i32
    %c0_i32_0 = arith.constant 0 : i32
    %c0_i32_1 = arith.constant 0 : i32
    return %c0_i32, %c0_i32_0 : i32, i32
  }
  func.func @transform_2(%arg0: i32) -> (i32, i32) {
    %c0_i32 = arith.constant 0 : i32
    %c0_i32_0 = arith.constant 0 : i32
    %c0_i32_1 = arith.constant 0 : i32
    return %c0_i32, %c0_i32_0 : i32, i32
  }
  func.func @transform_3(%arg0: i32) -> (i32, i32, i32) {
    %c0_i32 = arith.constant 0 : i32
    %c0_i32_0 = arith.constant 0 : i32
    %c0_i32_1 = arith.constant 0 : i32
    %c0_i32_2 = arith.constant 0 : i32
    return %c0_i32, %c0_i32_0, %c0_i32_1 : i32, i32, i32
  }
  func.func @transform_4(%arg0: i32) -> (i32, i32) {
    %c0_i32 = arith.constant 0 : i32
    %c0_i32_0 = arith.constant 0 : i32
    %c0_i32_1 = arith.constant 0 : i32
    return %c0_i32, %c0_i32_0 : i32, i32
  }
  func.func @transform_5(%arg0: i32) -> (i32, i32) {
    %c0_i32 = arith.constant 0 : i32
    %c0_i32_0 = arith.constant 0 : i32
    %c0_i32_1 = arith.constant 0 : i32
    return %c0_i32, %c0_i32_0 : i32, i32
  }
  func.func @transform_6(%arg0: i32) -> (i32, i32) {
    %c0_i32 = arith.constant 0 : i32
    %c0_i32_0 = arith.constant 0 : i32
    %c0_i32_1 = arith.constant 0 : i32
    return %c0_i32, %c0_i32_0 : i32, i32
  }
  func.func @transform_7(%arg0: i32) -> (i32, i32, i32) {
    %c0_i32 = arith.constant 0 : i32
    %c0_i32_0 = arith.constant 0 : i32
    %c0_i32_1 = arith.constant 0 : i32
    return %arg0, %c0_i32, %c0_i32_0 : i32, i32, i32
  }
}

</mosaic_0001>

<llo_original>
// kernel: unidirectional_conv2d_forward.1
$region0: #{unidirectional_conv2d_forward.1}
  #allocation0 [shape = 'u32[]', space=smem, size = 0x4, offset = 0x4, fixed_abs, tag = 'smem constant byte address 0x4 - core index']
  #allocation1 [shape = 'u32[144,128]{1,0:T(1,128)}', space=vmem, size = 0x12000, scoped, tag = 'internal scratch']
  %s0 = inlined_call_operand.vmem [shape: bf16[2,16,54], index: 0, kind: input, shape index: {}]
  %s1 = inlined_call_operand.vmem [shape: bf16[54,144], index: 1, kind: input, shape index: {}]
  %s2 = inlined_call_operand.vmem [shape: f32[1,144], index: 2, kind: input, shape index: {}]
  %s3 = inlined_call_operand.vmem [shape: bf16[3,144,128], index: 3, kind: input, shape index: {}]
  %s4 = inlined_call_operand.vmem [shape: f32[1,128], index: 4, kind: input, shape index: {}]
  %s5 = inlined_call_operand.vmem [shape: bf16[128,32], index: 5, kind: input, shape index: {}]
  %s6 = inlined_call_operand.vmem [shape: f32[1,32], index: 6, kind: input, shape index: {}]
  %s7 = inlined_call_operand.vmem [shape: f32[2,8,32], index: 7, kind: output, shape index: {}]
  %s8 = sld [smem:[#allocation0]]
  $region61: #{unidirectional_conv2d_forward.1} parent=0
    _
  %s10 = ssub.s32 1, %s8
  %s11 = scalar_select 0, %s10, %s8
  loop: start=0, step=1, limit=4
  $region2: #{unidirectional_conv2d_forward.1} parent=0 // loop_pre_header
    _
  $region3: #{unidirectional_conv2d_forward.1} parent=0 // loop_header
    %s13 = sphi 0, %s17
    %p14 = scmp.ge.s32.totalorder %s13, 4
    %s23 = sphi 0, %s25
    %s26 = sphi 0, %s23
    %s27 = sphi 0, %s26
    %s43 = sphi 0, %s27
    %s47 = sphi 0, %s47
    %s49 = sphi 0, %s47
    %s50 = sphi 0, %s49
    %s64 = sphi 0, %s50
    %s68 = sphi 0, %s68
    %s70 = sphi 0, %s68
    %s71 = sphi 0, %s70
    %s85 = sphi 0, %s71
    %s89 = sphi 0, %s89
    %s91 = sphi 0, %s89
    %s92 = sphi 0, %s91
    %s106 = sphi 0, %s92
    %s110 = sphi 0, %s110
    %s112 = sphi 0, %s110
    %s113 = sphi 0, %s112
    %s127 = sphi 0, %s113
    %s131 = sphi 0, %s131
    %s133 = sphi 0, %s131
    %s134 = sphi 0, %s133
    %s148 = sphi 0, %s134
    %s152 = sphi 0, %s152
    %s154 = sphi 0, %s152
    %s155 = sphi 0, %s154
    %s169 = sphi 0, %s155
    %s175 = sphi 0, %s177
    %s178 = sphi 0, %s175
    %s179 = sphi 0, %s178
    %s195 = sphi 0, %s179
  $region4: #{unidirectional_conv2d_forward.1} parent=0 // loop_header_branch
    %16 = sbr.rel (%p14) target = $region8
  $region5: #{unidirectional_conv2d_forward.1} parent=0 // loop_body
    %s18 = ssub.s32 %s13, 1
    %s19 = ssub.s32 %s13, 2
    %s20 = sadd.s32 %s13, 1
    %s21 = ssub.s32 %s13, %s20
    %p22 = scmp.eq.s32.totalorder %s21, 0
    %s24 = sadd.s32 %s23, 1
    %s25 = scalar_select %p22, %s23, %s24
    %p28 = pneg %p22
    %p29 = scmp.eq.s32.totalorder %s13, 1
    %p30 = por %p28, %p29
    %p31 = scmp.ne.s32.totalorder %s23, %s26
    %p32 = scmp.eq.s32.totalorder %s13, 0
    %p33 = por %p31, %p32
    %p34 = scmp.ne.s32.totalorder %s23, %s26
    %p35 = scmp.eq.s32.totalorder %s18, 1
    %p36 = por %p34, %p35
    %p37 = scmp.ne.s32.totalorder %s26, %s27
    %p38 = scmp.eq.s32.totalorder %s18, 0
    %p39 = por %p37, %p38
    %p40 = scmp.ne.s32.totalorder %s26, %s27
    %p41 = scmp.eq.s32.totalorder %s19, 1
    %p42 = por %p40, %p41
    %p44 = scmp.ne.s32.totalorder %s27, %s43
    %p45 = scmp.eq.s32.totalorder %s19, 0
    %p46 = por %p44, %p45
    %s48 = sadd.s32 %s47, 1
    %p51 = scmp.eq.s32.totalorder %s13, 1
    %p52 = scmp.ne.s32.totalorder %s47, %s49
    %p53 = scmp.eq.s32.totalorder %s13, 0
    %p54 = por %p52, %p53
    %p55 = scmp.ne.s32.totalorder %s47, %s49
    %p56 = scmp.eq.s32.totalorder %s18, 1
    %p57 = por %p55, %p56
    %p58 = scmp.ne.s32.totalorder %s49, %s50
    %p59 = scmp.eq.s32.totalorder %s18, 0
    %p60 = por %p58, %p59
    %p61 = scmp.ne.s32.totalorder %s49, %s50
    %p62 = scmp.eq.s32.totalorder %s19, 1
    %p63 = por %p61, %p62
    %p65 = scmp.ne.s32.totalorder %s50, %s64
    %p66 = scmp.eq.s32.totalorder %s19, 0
    %p67 = por %p65, %p66
    %s69 = sadd.s32 %s68, 1
    %p72 = scmp.eq.s32.totalorder %s13, 1
    %p73 = scmp.ne.s32.totalorder %s68, %s70
    %p74 = scmp.eq.s32.totalorder %s13, 0
    %p75 = por %p73, %p74
    %p76 = scmp.ne.s32.totalorder %s68, %s70
    %p77 = scmp.eq.s32.totalorder %s18, 1
    %p78 = por %p76, %p77
    %p79 = scmp.ne.s32.totalorder %s70, %s71
    %p80 = scmp.eq.s32.totalorder %s18, 0
    %p81 = por %p79, %p80
    %p82 = scmp.ne.s32.totalorder %s70, %s71
    %p83 = scmp.eq.s32.totalorder %s19, 1
    %p84 = por %p82, %p83
    %p86 = scmp.ne.s32.totalorder %s71, %s85
    %p87 = scmp.eq.s32.totalorder %s19, 0
    %p88 = por %p86, %p87
    %s90 = sadd.s32 %s89, 1
    %p93 = scmp.eq.s32.totalorder %s13, 1
    %p94 = scmp.ne.s32.totalorder %s89, %s91
    %p95 = scmp.eq.s32.totalorder %s13, 0
    %p96 = por %p94, %p95
    %p97 = scmp.ne.s32.totalorder %s89, %s91
    %p98 = scmp.eq.s32.totalorder %s18, 1
    %p99 = por %p97, %p98
    %p100 = scmp.ne.s32.totalorder %s91, %s92
    %p101 = scmp.eq.s32.totalorder %s18, 0
    %p102 = por %p100, %p101
    %p103 = scmp.ne.s32.totalorder %s91, %s92
    %p104 = scmp.eq.s32.totalorder %s19, 1
    %p105 = por %p103, %p104
    %p107 = scmp.ne.s32.totalorder %s92, %s106
    %p108 = scmp.eq.s32.totalorder %s19, 0
    %p109 = por %p107, %p108
    %s111 = sadd.s32 %s110, 1
    %p114 = scmp.eq.s32.totalorder %s13, 1
    %p115 = scmp.ne.s32.totalorder %s110, %s112
    %p116 = scmp.eq.s32.totalorder %s13, 0
    %p117 = por %p115, %p116
    %p118 = scmp.ne.s32.totalorder %s110, %s112
    %p119 = scmp.eq.s32.totalorder %s18, 1
    %p120 = por %p118, %p119
    %p121 = scmp.ne.s32.totalorder %s112, %s113
    %p122 = scmp.eq.s32.totalorder %s18, 0
    %p123 = por %p121, %p122
    %p124 = scmp.ne.s32.totalorder %s112, %s113
    %p125 = scmp.eq.s32.totalorder %s19, 1
    %p126 = por %p124, %p125
    %p128 = scmp.ne.s32.totalorder %s113, %s127
    %p129 = scmp.eq.s32.totalorder %s19, 0
    %p130 = por %p128, %p129
    %s132 = sadd.s32 %s131, 1
    %p135 = scmp.eq.s32.totalorder %s13, 1
    %p136 = scmp.ne.s32.totalorder %s131, %s133
    %p137 = scmp.eq.s32.totalorder %s13, 0
    %p138 = por %p136, %p137
    %p139 = scmp.ne.s32.totalorder %s131, %s133
    %p140 = scmp.eq.s32.totalorder %s18, 1
    %p141 = por %p139, %p140
    %p142 = scmp.ne.s32.totalorder %s133, %s134
    %p143 = scmp.eq.s32.totalorder %s18, 0
    %p144 = por %p142, %p143
    %p145 = scmp.ne.s32.totalorder %s133, %s134
    %p146 = scmp.eq.s32.totalorder %s19, 1
    %p147 = por %p145, %p146
    %p149 = scmp.ne.s32.totalorder %s134, %s148
    %p150 = scmp.eq.s32.totalorder %s19, 0
    %p151 = por %p149, %p150
    %s153 = sadd.s32 %s152, 1
    %p156 = scmp.eq.s32.totalorder %s13, 1
    %p157 = scmp.ne.s32.totalorder %s152, %s154
    %p158 = scmp.eq.s32.totalorder %s13, 0
    %p159 = por %p157, %p158
    %p160 = scmp.ne.s32.totalorder %s152, %s154
    %p161 = scmp.eq.s32.totalorder %s18, 1
    %p162 = por %p160, %p161
    %p163 = scmp.ne.s32.totalorder %s154, %s155
    %p164 = scmp.eq.s32.totalorder %s18, 0
    %p165 = por %p163, %p164
    %p166 = scmp.ne.s32.totalorder %s154, %s155
    %p167 = scmp.eq.s32.totalorder %s19, 1
    %p168 = por %p166, %p167
    %p170 = scmp.ne.s32.totalorder %s155, %s169
    %p171 = scmp.eq.s32.totalorder %s19, 0
    %p172 = por %p170, %p171
    %s173 = ssub.s32 %s13, %s20
    %p174 = scmp.eq.s32.totalorder %s173, 0
    %s176 = sadd.s32 %s175, 1
    %s177 = scalar_select %p174, %s175, %s176
    %p180 = pneg %p174
    %p181 = scmp.eq.s32.totalorder %s13, 1
    %p182 = por %p180, %p181
    %p183 = scmp.ne.s32.totalorder %s175, %s178
    %p184 = scmp.eq.s32.totalorder %s13, 0
    %p185 = por %p183, %p184
    %p186 = scmp.ne.s32.totalorder %s175, %s178
    %p187 = scmp.eq.s32.totalorder %s18, 1
    %p188 = por %p186, %p187
    %p189 = scmp.ne.s32.totalorder %s178, %s179
    %p190 = scmp.eq.s32.totalorder %s18, 0
    %p191 = por %p189, %p190
    %p192 = scmp.ne.s32.totalorder %s178, %s179
    %p193 = scmp.eq.s32.totalorder %s19, 1
    %p194 = por %p192, %p193
    %p196 = scmp.ne.s32.totalorder %s179, %s195
    %p197 = scmp.eq.s32.totalorder %s19, 0
    %p198 = por %p196, %p197
    %p199 = scmp.le.s32.totalorder 1, %s13
    %p200 = scmp.lt.s32.totalorder %s13, 3
    %p201 = pnand %p199, %p200
    %p202 = pneg %p201
    // Predicated region
    $region9: #{unidirectional_conv2d_forward.1} parent=5 // pred_check
      _
    $region10: #{unidirectional_conv2d_forward.1} parent=5 // pred_check_branch
      %204 = sbr.rel (%p201) target = $region12
    $region11: #{unidirectional_conv2d_forward.1} parent=5 // pred_region
      %s205 = ssub.s32 %s13, 1
      // Predicated region
      $region13: #{unidirectional_conv2d_forward.1} parent=11 // pred_check
        %p206 = pneg %p60
      $region14: #{unidirectional_conv2d_forward.1} parent=11 // pred_check_branch
        %208 = sbr.rel (%p206) target = $region16
      $region15: #{unidirectional_conv2d_forward.1} parent=11 // pred_region
        _
      $region16: #{unidirectional_conv2d_forward.1} parent=11 // pred_fallthru
        _
      // Predicated region
      $region17: #{unidirectional_conv2d_forward.1} parent=11 // pred_check
        %p209 = pneg %p81
      $region18: #{unidirectional_conv2d_forward.1} parent=11 // pred_check_branch
        %211 = sbr.rel (%p209) target = $region20
      $region19: #{unidirectional_conv2d_forward.1} parent=11 // pred_region
        _
      $region20: #{unidirectional_conv2d_forward.1} parent=11 // pred_fallthru
        _
      // Predicated region
      $region21: #{unidirectional_conv2d_forward.1} parent=11 // pred_check
        %p212 = pneg %p102
      $region22: #{unidirectional_conv2d_forward.1} parent=11 // pred_check_branch
        %214 = sbr.rel (%p212) target = $region24
      $region23: #{unidirectional_conv2d_forward.1} parent=11 // pred_region
        _
      $region24: #{unidirectional_conv2d_forward.1} parent=11 // pred_fallthru
        _
      // Predicated region
      $region25: #{unidirectional_conv2d_forward.1} parent=11 // pred_check
        %p215 = pneg %p123
      $region26: #{unidirectional_conv2d_forward.1} parent=11 // pred_check_branch
        %217 = sbr.rel (%p215) target = $region28
      $region27: #{unidirectional_conv2d_forward.1} parent=11 // pred_region
        _
      $region28: #{unidirectional_conv2d_forward.1} parent=11 // pred_fallthru
        _
      // Predicated region
      $region29: #{unidirectional_conv2d_forward.1} parent=11 // pred_check
        %p218 = pneg %p144
      $region30: #{unidirectional_conv2d_forward.1} parent=11 // pred_check_branch
        %220 = sbr.rel (%p218) target = $region32
      $region31: #{unidirectional_conv2d_forward.1} parent=11 // pred_region
        _
      $region32: #{unidirectional_conv2d_forward.1} parent=11 // pred_fallthru
        _
      // Predicated region
      $region33: #{unidirectional_conv2d_forward.1} parent=11 // pred_check
        %p221 = pneg %p165
      $region34: #{unidirectional_conv2d_forward.1} parent=11 // pred_check_branch
        %223 = sbr.rel (%p221) target = $region36
      $region35: #{unidirectional_conv2d_forward.1} parent=11 // pred_region
        _
      $region36: #{unidirectional_conv2d_forward.1} parent=11 // pred_fallthru
        _
    $region12: #{unidirectional_conv2d_forward.1} parent=5 // pred_fallthru
      _
    %p224 = scmp.lt.s32.totalorder %s13, 2
    // Predicated region
    $region37: #{unidirectional_conv2d_forward.1} parent=5 // pred_check
      %p225 = pneg %p224
    $region38: #{unidirectional_conv2d_forward.1} parent=5 // pred_check_branch
      %227 = sbr.rel (%p225) target = $region40
    $region39: #{unidirectional_conv2d_forward.1} parent=5 // pred_region
      // Predicated region
      $region41: #{unidirectional_conv2d_forward.1} parent=39 // pred_check
        %p228 = pneg %p33
      $region42: #{unidirectional_conv2d_forward.1} parent=39 // pred_check_branch
        %230 = sbr.rel (%p228) target = $region44
      $region43: #{unidirectional_conv2d_forward.1} parent=39 // pred_region
        %p231 = scmp.lt.s32.totalorder %s13, 1
        %s232 = scalar_select %p231, %s13, 1
        %s233 = smul.addr %s232, 2
        %s234 = smul.addr %s233, 4
        %s235 = scalar_lea.vmem %s0, %s234
      $region44: #{unidirectional_conv2d_forward.1} parent=39 // pred_fallthru
        _
    $region40: #{unidirectional_conv2d_forward.1} parent=5 // pred_fallthru
      _
    %p236 = scmp.le.s32.totalorder 1, %s13
    %p237 = scmp.lt.s32.totalorder %s13, 3
    %p238 = pnand %p236, %p237
    %p239 = pneg %p238
    // Predicated region
    $region45: #{unidirectional_conv2d_forward.1} parent=5 // pred_check
      _
    $region46: #{unidirectional_conv2d_forward.1} parent=5 // pred_check_branch
      %241 = sbr.rel (%p238) target = $region48
    $region47: #{unidirectional_conv2d_forward.1} parent=5 // pred_region
      %s242 = ssub.s32 %s13, 1
      %p243 = scmp.lt.s32.totalorder %s18, 1
      %s244 = scalar_select %p243, %s18, 1
      %s245 = smul.addr %s244, 2
      %s246 = smul.addr %s245, 4
      %s247 = scalar_lea.vmem %s0, %s246
      %p248 = pneg %p39
      %p249 = pneg %p36
      %p250 = pneg %p60
      %p251 = pneg %p57
      %p252 = pneg %p81
      %p253 = pneg %p78
      %p254 = pneg %p102
      %p255 = pneg %p99
      %p256 = pneg %p123
      %p257 = pneg %p120
      %p258 = pneg %p144
      %p259 = pneg %p141
      %p260 = pneg %p165
      %p261 = pneg %p162
      %p262 = pneg %p191
      %p263 = pneg %p188
      %p264 = scmp.lt.s32.totalorder %s18, 1
      %s265 = scalar_select %p264, %s18, 1
      %s266 = smul.addr %s265, 8
      %s267 = scalar_lea.vmem %s7, %s266
      %p268 = scmp.lt.s32.totalorder %s18, 1
      %s269 = scalar_select %p268, %s18, 1
      %s270 = smul.addr %s269, 2
      %s271 = smul.addr %s270, 4
      %s272 = scalar_lea.vmem %s0, %s271
      %p273 = scmp.lt.s32.totalorder %s18, 1
      %s274 = scalar_select %p273, %s18, 1
      %s275 = smul.addr %s274, 8
      %s276 = scalar_lea.vmem %s7, %s275
      %v278 = vld [vmem:[%s272] sm:$0xf]
      %v279 = vld [vmem:[%s272 + $0x4] sm:$0xf]
      %v280 = vld [vmem:[%s1] sm:$0xff]
      %v281 = vld [vmem:[%s1 + $0x8] sm:$0xff]
      %v282 = vld [vmem:[%s1 + $0x10] sm:$0xff]
      %v283 = vld [vmem:[%s1 + $0x18] sm:$0xff]
      %v284 = vld [vmem:[%s1 + $0x20] sm:$0xff]
      %v285 = vld [vmem:[%s1 + $0x28] sm:$0xff]
      %v286 = vld [vmem:[%s1 + $0x30] sm:$0x77]
      %v287 = vld [vmem:[%s2] sm:$0x3]
      %v289 = vlaneseq
      %v290 = vshrl.u32 %v289, 7
      %v291 = vsub.s32 0, %v290
      %v292 = vrot.slane %v287, %v291
      %v293 = vlaneseq
      %v294 = vshrl.u32 %v293, 7
      %v295 = vsub.s32 1, %v294
      %v296 = vrot.slane %v287, %v295
      %v301 = vunpack.c.l.b16 %v278
      %v302 = vunpack.c.l.b16 %v279
      %v303 = vpack.c.b16 %v302, %v301
      %v311 = vunpack.c.l.b16 %v280
      %v312 = vunpack.c.h.b16 %v280
      %v313 = vunpack.c.l.b16 %v281
      %v314 = vunpack.c.h.b16 %v281
      %v315 = vunpack.c.l.b16 %v282
      %v316 = vunpack.c.h.b16 %v282
      %v317 = vunpack.c.l.b16 %v283
      %v318 = vunpack.c.h.b16 %v283
      %v319 = vunpack.c.l.b16 %v284
      %v320 = vunpack.c.h.b16 %v284
      %v321 = vunpack.c.l.b16 %v285
      %v322 = vunpack.c.h.b16 %v285
      %v323 = vunpack.c.l.b16 %v286
      %v324 = vunpack.c.h.b16 %v286
      %v325 = vpack.c.b16 %v313, %v311
      %v326 = vpack.c.b16 %v314, %v312
      %v327 = vpack.c.b16 %v317, %v315
      %v328 = vpack.c.b16 %v318, %v316
      %v329 = vpack.c.b16 %v321, %v319
      %v330 = vpack.c.b16 %v322, %v320
      %v331 = vpack.c.b16 %v323, %v323
      %v332 = vpack.c.b16 %v324, %v324
      %vm339 = vcmask 441344
      %v341 = vsel %vm339, %v303, 0
      %vm343 = vcmask 1042432
      %v345 = vsel %vm343, %v331, 0
      %v348 = vsel %vm343, %v332, 0
      %350 = vmatprep.subr.bf16.mxu0 0
      %351 = vmatpush1.bf16.msra.mxu0 0
      %352 = vmatprep.subr.bf16.mxu0 0
      %353 = vmatpush1.bf16.msra.mxu0 0
      %354 = vmatprep.subr.bf16.mxu0 0
      %355 = vmatpush1.bf16.msra.mxu0 0
      %356 = vmatprep.subr.bf16.mxu0 0
      %357 = vmatpush1.bf16.msra.mxu0 0
      %358 = vmatprep.subr.bf16.mxu0 %v348
      %359 = vmatpush1.bf16.msra.mxu0 %v345
      %360 = vmatprep.subr.bf16.mxu0 %v330
      %361 = vmatpush1.bf16.msra.mxu0 %v329
      %362 = vmatprep.subr.bf16.mxu0 %v328
      %363 = vmatpush1.bf16.msra.mxu0 %v327
      %364 = vmatprep.subr.bf16.mxu0 %v326
      %365 = vmatpush1.bf16.msra.mxu0 %v325
      %366 = vmatprep.subr.bf16.mxu0 0
      %367 = vmatpush2.bf16.msra.mxu0 0
      %368 = vmatprep.subr.bf16.mxu0 0
      %369 = vmatpush2.bf16.msra.mxu0 0
      %370 = vmatprep.subr.bf16.mxu0 0
      %371 = vmatpush2.bf16.msra.mxu0 0
      %372 = vmatprep.subr.bf16.mxu0 0
      %373 = vmatpush2.bf16.msra.mxu0 0
      %374 = vmatprep.subr.bf16.mxu0 0
      %375 = vmatpush2.bf16.msra.mxu0 0
      %376 = vmatprep.subr.bf16.mxu0 0
      %377 = vmatpush2.bf16.msra.mxu0 0
      %378 = vmatprep.subr.bf16.mxu0 0
      %379 = vmatpush2.bf16.msra.mxu0 0
      %380 = vmatprep.subr.bf16.mxu0 0
      %381 = vmatpush2.bf16.msra.mxu0 0
      %382 = vmatprep.mubr.bf16.mxu0 0
      %383 = vmatmul.mubr.bf16.gmra.mxu0 %v341
      %v384 = vpop.f32.mrf.mxu0
      %v385 = vadd.f32 %v292, %v384
      %v386 = vpop.f32.mrf.mxu0
      %v387 = vadd.f32 %v296, %v386
      %v388 = vpop.f32.mrf.mxu0
      %v389 = vadd.f32 %v292, %v388
      %v390 = vpop.f32.mrf.mxu0
      %v391 = vadd.f32 %v296, %v390
      %392 = vdwg.mxu0
      %v393 = vmax.f32 %v385, 0.0
      %v394 = vmax.f32 %v387, 0.0
      %v395 = vmax.f32 %v389, 0.0
      %v396 = vmax.f32 %v391, 0.0
      %v397 = vpack.c.bf16 %v393, %v393
      %v398 = vpack.c.bf16 %v394, %v394
      %v399 = vpack.c.bf16 %v395, %v395
      %v400 = vpack.c.bf16 %v396, %v396
      %v401 = vpack.c.bf16 %v395, %v393
      %v402 = vpack.c.bf16 %v396, %v394
      %v403 = vld [vmem:[%s3] sm:$0xf]
      %v404 = vld [vmem:[%s3 + $0x4] sm:$0xf]
      %v405 = vld [vmem:[%s3 + $0x8] sm:$0xf]
      %v406 = vld [vmem:[%s3 + $0xc] sm:$0xf]
      %v407 = vld [vmem:[%s3 + $0x10] sm:$0xf]
      %v408 = vld [vmem:[%s3 + $0x14] sm:$0xf]
      %v409 = vld [vmem:[%s3 + $0x18] sm:$0xf]
      %v410 = vld [vmem:[%s3 + $0x1c] sm:$0xf]
      %v411 = vld [vmem:[%s3 + $0x20] sm:$0xf]
      %v412 = vld [vmem:[%s3 + $0x24] sm:$0xf]
      %v413 = vld [vmem:[%s3 + $0x28] sm:$0xf]
      %v414 = vld [vmem:[%s3 + $0x2c] sm:$0xf]
      %v415 = vld [vmem:[%s3 + $0x30] sm:$0xf]
      %v416 = vld [vmem:[%s3 + $0x34] sm:$0xf]
      %v417 = vld [vmem:[%s3 + $0x38] sm:$0xf]
      %v418 = vld [vmem:[%s3 + $0x3c] sm:$0xf]
      %v419 = vld [vmem:[%s3 + $0x40] sm:$0xf]
      %v420 = vld [vmem:[%s3 + $0x44] sm:$0xf]
      %s421 = scalar_lea.vmem %s3, 72
      %v422 = vld [vmem:[%s421] sm:$0xf]
      %v423 = vld [vmem:[%s421 + $0x4] sm:$0xf]
      %v424 = vld [vmem:[%s421 + $0x8] sm:$0xf]
      %v425 = vld [vmem:[%s421 + $0xc] sm:$0xf]
      %v426 = vld [vmem:[%s421 + $0x10] sm:$0xf]
      %v427 = vld [vmem:[%s421 + $0x14] sm:$0xf]
      %v428 = vld [vmem:[%s421 + $0x18] sm:$0xf]
      %v429 = vld [vmem:[%s421 + $0x1c] sm:$0xf]
      %v430 = vld [vmem:[%s421 + $0x20] sm:$0xf]
      %v431 = vld [vmem:[%s421 + $0x24] sm:$0xf]
      %v432 = vld [vmem:[%s421 + $0x28] sm:$0xf]
      %v433 = vld [vmem:[%s421 + $0x2c] sm:$0xf]
      %v434 = vld [vmem:[%s421 + $0x30] sm:$0xf]
      %v435 = vld [vmem:[%s421 + $0x34] sm:$0xf]
      %v436 = vld [vmem:[%s421 + $0x38] sm:$0xf]
      %v437 = vld [vmem:[%s421 + $0x3c] sm:$0xf]
      %v438 = vld [vmem:[%s421 + $0x40] sm:$0xf]
      %v439 = vld [vmem:[%s421 + $0x44] sm:$0xf]
      %v458 = vunpack.c.l.b16 %v422
      %v459 = vunpack.c.l.b16 %v423
      %v460 = vunpack.c.l.b16 %v424
      %v461 = vunpack.c.l.b16 %v425
      %v462 = vunpack.c.l.b16 %v426
      %v463 = vunpack.c.l.b16 %v427
      %v464 = vunpack.c.l.b16 %v428
      %v465 = vunpack.c.l.b16 %v429
      %v466 = vunpack.c.l.b16 %v430
      %v467 = vunpack.c.l.b16 %v431
      %v468 = vunpack.c.l.b16 %v432
      %v469 = vunpack.c.l.b16 %v433
      %v470 = vunpack.c.l.b16 %v434
      %v471 = vunpack.c.l.b16 %v435
      %v472 = vunpack.c.l.b16 %v436
      %v473 = vunpack.c.l.b16 %v437
      %v474 = vunpack.c.l.b16 %v438
      %v475 = vunpack.c.l.b16 %v439
      %v476 = vpack.c.b16 %v459, %v458
      %v477 = vpack.c.b16 %v461, %v460
      %v478 = vpack.c.b16 %v463, %v462
      %v479 = vpack.c.b16 %v465, %v464
      %v480 = vpack.c.b16 %v467, %v466
      %v481 = vpack.c.b16 %v469, %v468
      %v482 = vpack.c.b16 %v471, %v470
      %v483 = vpack.c.b16 %v473, %v472
      %v484 = vpack.c.b16 %v475, %v474
      %vm494 = vcmask 130048
      %v496 = vsel %vm494, %v400, 0
      %498 = vmatprep.subr.bf16.mxu0 0
      %499 = vmatpush1.bf16.msra.mxu0 %v483
      %500 = vmatprep.subr.bf16.mxu0 0
      %501 = vmatpush1.bf16.msra.mxu0 %v482
      %502 = vmatprep.subr.bf16.mxu0 0
      %503 = vmatpush1.bf16.msra.mxu0 %v481
      %504 = vmatprep.subr.bf16.mxu0 0
      %505 = vmatpush1.bf16.msra.mxu0 %v480
      %506 = vmatprep.subr.bf16.mxu0 0
      %507 = vmatpush1.bf16.msra.mxu0 %v479
      %508 = vmatprep.subr.bf16.mxu0 0
      %509 = vmatpush1.bf16.msra.mxu0 %v478
      %510 = vmatprep.subr.bf16.mxu0 0
      %511 = vmatpush1.bf16.msra.mxu0 %v477
      %512 = vmatprep.subr.bf16.mxu0 0
      %513 = vmatpush1.bf16.msra.mxu0 %v476
      %514 = vmatprep.subr.bf16.mxu0 0
      %515 = vmatpush2.bf16.msra.mxu0 0
      %516 = vmatprep.subr.bf16.mxu0 0
      %517 = vmatpush2.bf16.msra.mxu0 0
      %518 = vmatprep.subr.bf16.mxu0 0
      %519 = vmatpush2.bf16.msra.mxu0 0
      %520 = vmatprep.subr.bf16.mxu0 0
      %521 = vmatpush2.bf16.msra.mxu0 0
      %522 = vmatprep.subr.bf16.mxu0 0
      %523 = vmatpush2.bf16.msra.mxu0 0
      %524 = vmatprep.subr.bf16.mxu0 0
      %525 = vmatpush2.bf16.msra.mxu0 0
      %526 = vmatprep.subr.bf16.mxu0 0
      %527 = vmatpush2.bf16.msra.mxu0 0
      %528 = vmatprep.subr.bf16.mxu0 0
      %529 = vmatpush2.bf16.msra.mxu0 %v484
      %530 = vmatprep.mubr.bf16.mxu0 %v496
      %531 = vmatmul.mubr.bf16.gmra.mxu0 %v399
      %v532 = vpop.f32.mrf.mxu0
      %v533 = vadd.f32 0.0, %v532
      %v534 = vpop.f32.mrf.mxu0
      %v535 = vpop.f32.mrf.mxu0
      %v536 = vpop.f32.mrf.mxu0
      %537 = vdwg.mxu0
      %v556 = vunpack.c.l.b16 %v403
      %v557 = vunpack.c.l.b16 %v404
      %v558 = vunpack.c.l.b16 %v405
      %v559 = vunpack.c.l.b16 %v406
      %v560 = vunpack.c.l.b16 %v407
      %v561 = vunpack.c.l.b16 %v408
      %v562 = vunpack.c.l.b16 %v409
      %v563 = vunpack.c.l.b16 %v410
      %v564 = vunpack.c.l.b16 %v411
      %v565 = vunpack.c.l.b16 %v412
      %v566 = vunpack.c.l.b16 %v413
      %v567 = vunpack.c.l.b16 %v414
      %v568 = vunpack.c.l.b16 %v415
      %v569 = vunpack.c.l.b16 %v416
      %v570 = vunpack.c.l.b16 %v417
      %v571 = vunpack.c.l.b16 %v418
      %v572 = vunpack.c.l.b16 %v419
      %v573 = vunpack.c.l.b16 %v420
      %v574 = vpack.c.b16 %v557, %v556
      %v575 = vpack.c.b16 %v559, %v558
      %v576 = vpack.c.b16 %v561, %v560
      %v577 = vpack.c.b16 %v563, %v562
      %v578 = vpack.c.b16 %v565, %v564
      %v579 = vpack.c.b16 %v567, %v566
      %v580 = vpack.c.b16 %v569, %v568
      %v581 = vpack.c.b16 %v571, %v570
      %v582 = vpack.c.b16 %v573, %v572
      %v593 = vsel %vm494, %v398, 0
      %595 = vmatprep.subr.bf16.mxu0 0
      %596 = vmatpush1.bf16.msra.mxu0 %v581
      %597 = vmatprep.subr.bf16.mxu0 0
      %598 = vmatpush1.bf16.msra.mxu0 %v580
      %599 = vmatprep.subr.bf16.mxu0 0
      %600 = vmatpush1.bf16.msra.mxu0 %v579
      %601 = vmatprep.subr.bf16.mxu0 0
      %602 = vmatpush1.bf16.msra.mxu0 %v578
      %603 = vmatprep.subr.bf16.mxu0 0
      %604 = vmatpush1.bf16.msra.mxu0 %v577
      %605 = vmatprep.subr.bf16.mxu0 0
      %606 = vmatpush1.bf16.msra.mxu0 %v576
      %607 = vmatprep.subr.bf16.mxu0 0
      %608 = vmatpush1.bf16.msra.mxu0 %v575
      %609 = vmatprep.subr.bf16.mxu0 0
      %610 = vmatpush1.bf16.msra.mxu0 %v574
      %611 = vmatprep.subr.bf16.mxu0 0
      %612 = vmatpush2.bf16.msra.mxu0 0
      %613 = vmatprep.subr.bf16.mxu0 0
      %614 = vmatpush2.bf16.msra.mxu0 0
      %615 = vmatprep.subr.bf16.mxu0 0
      %616 = vmatpush2.bf16.msra.mxu0 0
      %617 = vmatprep.subr.bf16.mxu0 0
      %618 = vmatpush2.bf16.msra.mxu0 0
      %619 = vmatprep.subr.bf16.mxu0 0
      %620 = vmatpush2.bf16.msra.mxu0 0
      %621 = vmatprep.subr.bf16.mxu0 0
      %622 = vmatpush2.bf16.msra.mxu0 0
      %623 = vmatprep.subr.bf16.mxu0 0
      %624 = vmatpush2.bf16.msra.mxu0 0
      %625 = vmatprep.subr.bf16.mxu0 0
      %626 = vmatpush2.bf16.msra.mxu0 %v582
      %627 = vmatprep.mubr.bf16.mxu0 %v593
      %628 = vmatmul.mubr.bf16.gmra.mxu0 %v397
      %v629 = vpop.f32.mrf.mxu0
      %v630 = vadd.f32 %v533, %v629
      %v631 = vpop.f32.mrf.mxu0
      %v632 = vpop.f32.mrf.mxu0
      %v633 = vpop.f32.mrf.mxu0
      %634 = vdwg.mxu0
      %s635 = scalar_lea.vmem %s3, 144
      %v636 = vld [vmem:[%s635] sm:$0xf]
      %v637 = vld [vmem:[%s635 + $0x4] sm:$0xf]
      %v638 = vld [vmem:[%s635 + $0x8] sm:$0xf]
      %v639 = vld [vmem:[%s635 + $0xc] sm:$0xf]
      %v640 = vld [vmem:[%s635 + $0x10] sm:$0xf]
      %v641 = vld [vmem:[%s635 + $0x14] sm:$0xf]
      %v642 = vld [vmem:[%s635 + $0x18] sm:$0xf]
      %v643 = vld [vmem:[%s635 + $0x1c] sm:$0xf]
      %v644 = vld [vmem:[%s635 + $0x20] sm:$0xf]
      %v645 = vld [vmem:[%s635 + $0x24] sm:$0xf]
      %v646 = vld [vmem:[%s635 + $0x28] sm:$0xf]
      %v647 = vld [vmem:[%s635 + $0x2c] sm:$0xf]
      %v648 = vld [vmem:[%s635 + $0x30] sm:$0xf]
      %v649 = vld [vmem:[%s635 + $0x34] sm:$0xf]
      %v650 = vld [vmem:[%s635 + $0x38] sm:$0xf]
      %v651 = vld [vmem:[%s635 + $0x3c] sm:$0xf]
      %v652 = vld [vmem:[%s635 + $0x40] sm:$0xf]
      %v653 = vld [vmem:[%s635 + $0x44] sm:$0xf]
      %v655 = vshrl.u32 %v401, 16
      %v657 = vshll.u32 %v401, 16
      %v659 = vrot.slane %v657, 1
      %v660 = vor.u32 %v655, %v659
      %v662 = vshrl.u32 %v402, 16
      %v664 = vshll.u32 %v402, 16
      %v666 = vrot.slane %v664, 1
      %v667 = vor.u32 %v662, %v666
      %v687 = vunpack.c.l.b16 %v636
      %v688 = vunpack.c.l.b16 %v637
      %v689 = vunpack.c.l.b16 %v638
      %v690 = vunpack.c.l.b16 %v639
      %v691 = vunpack.c.l.b16 %v640
      %v692 = vunpack.c.l.b16 %v641
      %v693 = vunpack.c.l.b16 %v642
      %v694 = vunpack.c.l.b16 %v643
      %v695 = vunpack.c.l.b16 %v644
      %v696 = vunpack.c.l.b16 %v645
      %v697 = vunpack.c.l.b16 %v646
      %v698 = vunpack.c.l.b16 %v647
      %v699 = vunpack.c.l.b16 %v648
      %v700 = vunpack.c.l.b16 %v649
      %v701 = vunpack.c.l.b16 %v650
      %v702 = vunpack.c.l.b16 %v651
      %v703 = vunpack.c.l.b16 %v652
      %v704 = vunpack.c.l.b16 %v653
      %v705 = vpack.c.b16 %v688, %v687
      %v706 = vpack.c.b16 %v690, %v689
      %v707 = vpack.c.b16 %v692, %v691
      %v708 = vpack.c.b16 %v694, %v693
      %v709 = vpack.c.b16 %v696, %v695
      %v710 = vpack.c.b16 %v698, %v697
      %v711 = vpack.c.b16 %v700, %v699
      %v712 = vpack.c.b16 %v702, %v701
      %v713 = vpack.c.b16 %v704, %v703
      %v724 = vsel %vm494, %v667, 0
      %726 = vmatprep.subr.bf16.mxu0 0
      %727 = vmatpush1.bf16.msra.mxu0 %v712
      %728 = vmatprep.subr.bf16.mxu0 0
      %729 = vmatpush1.bf16.msra.mxu0 %v711
      %730 = vmatprep.subr.bf16.mxu0 0
      %731 = vmatpush1.bf16.msra.mxu0 %v710
      %732 = vmatprep.subr.bf16.mxu0 0
      %733 = vmatpush1.bf16.msra.mxu0 %v709
      %734 = vmatprep.subr.bf16.mxu0 0
      %735 = vmatpush1.bf16.msra.mxu0 %v708
      %736 = vmatprep.subr.bf16.mxu0 0
      %737 = vmatpush1.bf16.msra.mxu0 %v707
      %738 = vmatprep.subr.bf16.mxu0 0
      %739 = vmatpush1.bf16.msra.mxu0 %v706
      %740 = vmatprep.subr.bf16.mxu0 0
      %741 = vmatpush1.bf16.msra.mxu0 %v705
      %742 = vmatprep.subr.bf16.mxu0 0
      %743 = vmatpush2.bf16.msra.mxu0 0
      %744 = vmatprep.subr.bf16.mxu0 0
      %745 = vmatpush2.bf16.msra.mxu0 0
      %746 = vmatprep.subr.bf16.mxu0 0
      %747 = vmatpush2.bf16.msra.mxu0 0
      %748 = vmatprep.subr.bf16.mxu0 0
      %749 = vmatpush2.bf16.msra.mxu0 0
      %750 = vmatprep.subr.bf16.mxu0 0
      %751 = vmatpush2.bf16.msra.mxu0 0
      %752 = vmatprep.subr.bf16.mxu0 0
      %753 = vmatpush2.bf16.msra.mxu0 0
      %754 = vmatprep.subr.bf16.mxu0 0
      %755 = vmatpush2.bf16.msra.mxu0 0
      %756 = vmatprep.subr.bf16.mxu0 0
      %757 = vmatpush2.bf16.msra.mxu0 %v713
      %758 = vmatprep.mubr.bf16.mxu0 %v724
      %759 = vmatmul.mubr.bf16.gmra.mxu0 %v660
      %v760 = vpop.f32.mrf.mxu0
      %v761 = vadd.f32 0.0, %v760
      %v762 = vpop.f32.mrf.mxu0
      %v763 = vpop.f32.mrf.mxu0
      %v764 = vpop.f32.mrf.mxu0
      %765 = vdwg.mxu0
      %v766 = vadd.f32 %v630, %v761
      %v767 = vld [vmem:[%s4] sm:$0x1]
      %v769 = vlaneseq
      %v770 = vshrl.u32 %v769, 7
      %v771 = vsub.s32 0, %v770
      %v772 = vrot.slane %v767, %v771
      %v774 = vadd.f32 %v766, %v772
      %v775 = vmax.f32 %v774, 0.0
      %v776 = vpack.c.bf16 %v775, %v775
      %v777 = vld [vmem:[%s5] sm:$0xf]
      %v778 = vld [vmem:[%s5 + $0x4] sm:$0xf]
      %v779 = vld [vmem:[%s5 + $0x8] sm:$0xf]
      %v780 = vld [vmem:[%s5 + $0xc] sm:$0xf]
      %v781 = vld [vmem:[%s5 + $0x10] sm:$0xf]
      %v782 = vld [vmem:[%s5 + $0x14] sm:$0xf]
      %v783 = vld [vmem:[%s5 + $0x18] sm:$0xf]
      %v784 = vld [vmem:[%s5 + $0x1c] sm:$0xf]
      %v785 = vld [vmem:[%s5 + $0x20] sm:$0xf]
      %v786 = vld [vmem:[%s5 + $0x24] sm:$0xf]
      %v787 = vld [vmem:[%s5 + $0x28] sm:$0xf]
      %v788 = vld [vmem:[%s5 + $0x2c] sm:$0xf]
      %v789 = vld [vmem:[%s5 + $0x30] sm:$0xf]
      %v790 = vld [vmem:[%s5 + $0x34] sm:$0xf]
      %v791 = vld [vmem:[%s5 + $0x38] sm:$0xf]
      %v792 = vld [vmem:[%s5 + $0x3c] sm:$0xf]
      %v793 = vld [vmem:[%s6] sm:$0x1]
      %v795 = vlaneseq
      %v796 = vshrl.u32 %v795, 7
      %v797 = vsub.s32 0, %v796
      %v798 = vrot.slane %v793, %v797
      %v816 = vunpack.c.l.b16 %v777
      %v817 = vunpack.c.l.b16 %v778
      %v818 = vunpack.c.l.b16 %v779
      %v819 = vunpack.c.l.b16 %v780
      %v820 = vunpack.c.l.b16 %v781
      %v821 = vunpack.c.l.b16 %v782
      %v822 = vunpack.c.l.b16 %v783
      %v823 = vunpack.c.l.b16 %v784
      %v824 = vunpack.c.l.b16 %v785
      %v825 = vunpack.c.l.b16 %v786
      %v826 = vunpack.c.l.b16 %v787
      %v827 = vunpack.c.l.b16 %v788
      %v828 = vunpack.c.l.b16 %v789
      %v829 = vunpack.c.l.b16 %v790
      %v830 = vunpack.c.l.b16 %v791
      %v831 = vunpack.c.l.b16 %v792
      %v832 = vpack.c.b16 %v817, %v816
      %v833 = vpack.c.b16 %v819, %v818
      %v834 = vpack.c.b16 %v821, %v820
      %v835 = vpack.c.b16 %v823, %v822
      %v836 = vpack.c.b16 %v825, %v824
      %v837 = vpack.c.b16 %v827, %v826
      %v838 = vpack.c.b16 %v829, %v828
      %v839 = vpack.c.b16 %v831, %v830
      %848 = vmatprep.subr.bf16.mxu0 0
      %849 = vmatpush1.bf16.msra.mxu0 %v839
      %850 = vmatprep.subr.bf16.mxu0 0
      %851 = vmatpush1.bf16.msra.mxu0 %v838
      %852 = vmatprep.subr.bf16.mxu0 0
      %853 = vmatpush1.bf16.msra.mxu0 %v837
      %854 = vmatprep.subr.bf16.mxu0 0
      %855 = vmatpush1.bf16.msra.mxu0 %v836
      %856 = vmatprep.subr.bf16.mxu0 0
      %857 = vmatpush1.bf16.msra.mxu0 %v835
      %858 = vmatprep.subr.bf16.mxu0 0
      %859 = vmatpush1.bf16.msra.mxu0 %v834
      %860 = vmatprep.subr.bf16.mxu0 0
      %861 = vmatpush1.bf16.msra.mxu0 %v833
      %862 = vmatprep.subr.bf16.mxu0 0
      %863 = vmatpush1.bf16.msra.mxu0 %v832
      %864 = vmatprep.subr.bf16.mxu0 0
      %865 = vmatpush2.bf16.msra.mxu0 0
      %866 = vmatprep.subr.bf16.mxu0 0
      %867 = vmatpush2.bf16.msra.mxu0 0
      %868 = vmatprep.subr.bf16.mxu0 0
      %869 = vmatpush2.bf16.msra.mxu0 0
      %870 = vmatprep.subr.bf16.mxu0 0
      %871 = vmatpush2.bf16.msra.mxu0 0
      %872 = vmatprep.subr.bf16.mxu0 0
      %873 = vmatpush2.bf16.msra.mxu0 0
      %874 = vmatprep.subr.bf16.mxu0 0
      %875 = vmatpush2.bf16.msra.mxu0 0
      %876 = vmatprep.subr.bf16.mxu0 0
      %877 = vmatpush2.bf16.msra.mxu0 0
      %878 = vmatprep.subr.bf16.mxu0 0
      %879 = vmatpush2.bf16.msra.mxu0 0
      %880 = vmatprep.mubr.bf16.mxu0 0
      %881 = vmatmul.mubr.bf16.gmra.mxu0 %v776
      %v882 = vpop.f32.mrf.mxu0
      %v883 = vadd.f32 %v798, %v882
      %v884 = vpop.f32.mrf.mxu0
      %v885 = vpop.f32.mrf.mxu0
      %v886 = vpop.f32.mrf.mxu0
      %887 = vdwg.mxu0
      %vm888 = vcmask 261120
      %889 = vst.msk [vmem:[%s276] sm:$0xff] %vm888, %v883
      %p890 = scmp.lt.s32.totalorder %s18, 1
      %s891 = scalar_select %p890, %s18, 1
      %s892 = smul.addr %s891, 8
      %s893 = scalar_lea.vmem %s7, %s892
      // Predicated region
      $region49: #{unidirectional_conv2d_forward.1} parent=47 // pred_check
        %p894 = pneg %p188
      $region50: #{unidirectional_conv2d_forward.1} parent=47 // pred_check_branch
        %896 = sbr.rel (%p894) target = $region52
      $region51: #{unidirectional_conv2d_forward.1} parent=47 // pred_region
        _
      $region52: #{unidirectional_conv2d_forward.1} parent=47 // pred_fallthru
        _
    $region48: #{unidirectional_conv2d_forward.1} parent=5 // pred_fallthru
      _
    %p897 = scmp.le.s32.totalorder 2, %s13
    // Predicated region
    $region53: #{unidirectional_conv2d_forward.1} parent=5 // pred_check
      %p898 = pneg %p897
    $region54: #{unidirectional_conv2d_forward.1} parent=5 // pred_check_branch
      %900 = sbr.rel (%p898) target = $region56
    $region55: #{unidirectional_conv2d_forward.1} parent=5 // pred_region
      %s901 = ssub.s32 %s13, 2
      // Predicated region
      $region57: #{unidirectional_conv2d_forward.1} parent=55 // pred_check
        %p902 = pneg %p194
      $region58: #{unidirectional_conv2d_forward.1} parent=55 // pred_check_branch
        %904 = sbr.rel (%p902) target = $region60
      $region59: #{unidirectional_conv2d_forward.1} parent=55 // pred_region
        %p905 = scmp.lt.s32.totalorder %s19, 1
        %s906 = scalar_select %p905, %s19, 1
        %s907 = smul.addr %s906, 8
        %s908 = scalar_lea.vmem %s7, %s907
      $region60: #{unidirectional_conv2d_forward.1} parent=55 // pred_fallthru
        _
    $region56: #{unidirectional_conv2d_forward.1} parent=5 // pred_fallthru
      _
  $region6: #{unidirectional_conv2d_forward.1} parent=0 // loop_footer
    %s17 = sadd.s32 1, %s13
  $region7: #{unidirectional_conv2d_forward.1} parent=0 // loop_footer_branch
    %12 = sbr.rel target = $region3
  $region8: #{unidirectional_conv2d_forward.1} parent=0 // loop_exit
    _

</llo_original>
